<compile_context>
chip_gen: v7x
topology: tpu7x:2x2x1
jax: 0.10.0
libtpu: 0.0.40
codegen_flags: <defaults>
</compile_context>

<pallas_src>
import functools
import math

import jax
import jax.numpy as jnp
from jax import lax
from jax.experimental import pallas as pl
from jax.experimental.pallas import tpu as pltpu

_LANE = 128


def _round_up(x, m):
    return (x + m - 1) // m * m


# -----------------------------------------------------------------------------
# 1. Gather path: embedding lookup by word id (the real workload for one-hot x).
# -----------------------------------------------------------------------------

def _gather_kernel(ids_ref, table_ref, bias_ref, o_ref, row_buf, sems, *, tm):
    # ids_ref  : SMEM [M_pad] int32            (scalar prefetch)
    # table_ref: HBM  [C, E_pad]               (memory_space=pl.ANY, manual DMA)
    # bias_ref : VMEM [1, E_pad]               (resident)
    # o_ref    : VMEM [tm, E_pad]
    # row_buf  : VMEM [tm, E_pad] scratch
    # sems     : DMA semaphores, shape (tm,)
    i = pl.program_id(0)
    copies = []
    for r in range(tm):                       # static unroll: tm independent row DMAs
        idx = ids_ref[i * tm + r]
        cp = pltpu.make_async_copy(
            table_ref.at[pl.ds(idx, 1), :],
            row_buf.at[pl.ds(r, 1), :],
            sems.at[r])
        cp.start()
        copies.append(cp)
    for cp in copies:
        cp.wait()
    o_ref[...] = (row_buf[...] + bias_ref[...]).astype(o_ref.dtype)


def prepare_embedding_table(weight, bias):
    """One-time layout prep (cache the result): [E, C] -> lane-padded [C, E_pad]."""
    E, _ = weight.shape
    e_pad = _round_up(E, _LANE)
    table = jnp.transpose(weight)                    # [C, E]
    bias2 = bias.reshape(1, E)
    if e_pad != E:
        table = jnp.pad(table, ((0, 0), (0, e_pad - E)))
        bias2 = jnp.pad(bias2, ((0, 0), (0, e_pad - E)))
    return table, bias2


def word_embedding_lookup(word_ids, table, bias2, embedding_dim, *, rows_per_step=8):
    """Embedding lookup: rows of `table` gathered by id, plus bias.

    word_ids: int array [...]
    table:    [output_classes, E_pad]   (from prepare_embedding_table, cached)
    bias2:    [1, E_pad]
    returns:  [..., embedding_dim]      == one_hot(word_ids) @ W.T + b
    """
    lead = word_ids.shape
    M = math.prod(lead) if lead else 1
    _, e_pad = table.shape

    tm = rows_per_step
    grid_m = pl.cdiv(M, tm)
    m_pad = grid_m * tm
    ids = word_ids.reshape(M).astype(jnp.int32)
    if m_pad != M:
        ids = jnp.pad(ids, (0, m_pad - M))           # tiny int32 pad only (safe in-range ids)

    out = pl.pallas_call(
        functools.partial(_gather_kernel, tm=tm),
        out_shape=jax.ShapeDtypeStruct((m_pad, e_pad), table.dtype),
        grid_spec=pltpu.PrefetchScalarGridSpec(
            num_scalar_prefetch=1,
            grid=(grid_m,),
            in_specs=[
                pl.BlockSpec(memory_space=pl.ANY),              # table stays in HBM
                pl.BlockSpec((1, e_pad), lambda i, ids: (0, 0)),  # bias resident
            ],
            out_specs=pl.BlockSpec((tm, e_pad), lambda i, ids: (i, 0)),
            scratch_shapes=[
                pltpu.VMEM((tm, e_pad), table.dtype),
                pltpu.SemaphoreType.DMA((tm,)),
            ]),
        compiler_params=pltpu.CompilerParams(
            dimension_semantics=("parallel",)),
    )(ids, table, bias2)

    return out[:M, :embedding_dim].reshape(*lead, embedding_dim)


# -----------------------------------------------------------------------------
# 2. Dense fallback: exact nn.Linear for arbitrary (not necessarily one-hot) x.
# -----------------------------------------------------------------------------

def _linear_kernel(x_ref, w_ref, b_ref, o_ref):
    # x_ref: [tm, C]   w_ref: [E_pad, C] (native PyTorch layout)   b_ref/o_ref: [*, E_pad]
    acc = lax.dot_general(
        x_ref[...], w_ref[...],
        dimension_numbers=(((1,), (1,)), ((), ())),   # contract C with C: no wrapper transpose
        preferred_element_type=jnp.float32)
    o_ref[...] = (acc + b_ref[...]).astype(o_ref.dtype)


def word_embedding_forward(x, weight, bias, *, block_rows=256, compute_dtype=None):
    """nn.Linear semantics: y = x @ weight.T + bias, for arbitrary x."""
    *lead, C = x.shape
    E, C_w = weight.shape
    assert C == C_w, "weight / input feature-dim mismatch"
    M = math.prod(lead) if lead else 1
    e_pad = _round_up(E, _LANE)

    x2 = x.reshape(M, C)
    w = weight
    b = bias.reshape(1, E)

    # Optional bf16 MXU inputs (v6e / v7x): halves weight HBM + VMEM; f32 accumulate.
    if compute_dtype is not None:
        if x2.dtype != compute_dtype:
            x2 = x2.astype(compute_dtype)
        if w.dtype != compute_dtype:
            w = w.astype(compute_dtype)

    # Lane-dense output: pad embedding dim to a multiple of 128 (rows of W, cols of b).
    if e_pad != E:
        w = jnp.pad(w, ((0, e_pad - E), (0, 0)))
        b = jnp.pad(b, ((0, 0), (0, e_pad - E)))
    if b.dtype != jnp.float32:
        b = b.astype(jnp.float32)

    # Row tile: whole problem in one step when small, else block_rows-row tiles.
    # No activation padding: last block may be ragged; OOB rows are never written.
    tm = M if M <= block_rows else block_rows
    grid_m = pl.cdiv(M, tm)

    # Scoped-VMEM request sized to the double-buffered working set (+ headroom).
    vmem_bytes = 2 * (tm * C * x2.dtype.itemsize
                      + e_pad * C * w.dtype.itemsize
                      + e_pad * b.dtype.itemsize
                      + tm * e_pad * 4)
    vmem_limit = int(min(max(vmem_bytes + (8 << 20), 16 << 20), 64 << 20))
    # TODO(synk): for very large vocab (resident weight near the v7x 64 MiB VMEM
    # budget), add a C-reduction grid axis ("arbitrary", last) with a VMEM f32
    # accumulator instead of keeping the whole weight resident.

    out = pl.pallas_call(
        _linear_kernel,
        out_shape=jax.ShapeDtypeStruct((M, e_pad), jnp.float32),
        grid_spec=pltpu.PrefetchScalarGridSpec(
            num_scalar_prefetch=0,
            grid=(grid_m,),
            in_specs=[
                pl.BlockSpec((tm, C), lambda i: (i, 0)),
                pl.BlockSpec((e_pad, C), lambda i: (0, 0)),   # weight resident, native [E, C]
                pl.BlockSpec((1, e_pad), lambda i: (0, 0)),   # bias resident
            ],
            out_specs=pl.BlockSpec((tm, e_pad), lambda i: (i, 0)),
        ),
        compiler_params=pltpu.CompilerParams(
            dimension_semantics=("parallel",),
            vmem_limit_bytes=vmem_limit),
    )(x2, w, b)

    return out[:, :E].reshape(*lead, E)


if __name__ == "__main__":
    B, S = 2, 8                                  # batch=2, seq=8
    output_classes, embedding_dim = 64, 32

    key = jax.random.PRNGKey(0)
    k_idx, k_w, k_b = jax.random.split(key, 3)

    word_ids = jax.random.randint(k_idx, (B, S), 0, output_classes)
    x = jax.nn.one_hot(word_ids, output_classes, dtype=jnp.float32)        # [B, S, C]
    weight = 0.1 * jax.random.normal(k_w, (embedding_dim, output_classes), jnp.float32)
    bias = 0.1 * jax.random.normal(k_b, (embedding_dim,), jnp.float32)

    # Exact reference for one-hot input (row lookup + bias).
    y_ref = (jnp.take(jnp.transpose(weight), word_ids.reshape(-1), axis=0)
             + bias).reshape(B, S, embedding_dim)

    # Fast path: gather weight rows by word id (table prepared/cached once).
    table, bias2 = prepare_embedding_table(weight, bias)
    y_gather = word_embedding_lookup(word_ids, table, bias2, embedding_dim)
    jax.block_until_ready(y_gather)
    assert y_gather.shape == (B, S, embedding_dim), f"bad output shape {y_gather.shape}"
    assert jnp.allclose(y_gather, y_ref, atol=1e-6, rtol=1e-6), "gather path mismatch"

    # Dense fallback: exact Linear semantics for arbitrary x (f32 MXU).
    y_dense = word_embedding_forward(x, weight, bias)
    jax.block_until_ready(y_dense)
    assert y_dense.shape == (B, S, embedding_dim), f"bad output shape {y_dense.shape}"
    assert jnp.allclose(y_dense, y_ref, atol=2e-3, rtol=2e-3), "dense path mismatch"

    # bf16 MXU inputs / f32 accumulation (v6e / v7x); one-hot x is exact in bf16,
    # only weight rounding differs from the f32 reference.
    y_bf16 = word_embedding_forward(x, weight, bias, compute_dtype=jnp.bfloat16)
    jax.block_until_ready(y_bf16)
    assert jnp.allclose(y_bf16, y_ref, atol=2e-2, rtol=2e-2), "bf16 dense path mismatch"

    print("KERNEL_OK")
</pallas_src>

<mosaic_0001>
module attributes {stable_mosaic.version = 11 : i64} {
  func.func @_gather_kernel(%arg0: i32, %arg1: memref<16xi32, #tpu.memory_space<smem>>, %arg2: memref<64x128xf32, #tpu.memory_space<any>>, %arg3: memref<1x128xf32, #tpu.memory_space<vmem>>, %arg4: memref<8x128xf32, #tpu.memory_space<vmem>>, %arg5: memref<8x128xf32, #tpu.memory_space<vmem>>, %arg6: memref<8x!tpu.dma_semaphore, #tpu.memory_space<semaphore_mem>>) attributes {dimension_semantics = [#tpu.dimension_semantics<parallel>], iteration_bounds = array<i64: 2>, scalar_prefetch = 1 : i64, scratch_operands = 2 : i64, tpu.core_type = #tpu.core_type<tc>, window_params = [{}, {pipeline_mode = #tpu.pipeline_mode<synchronous>, transform_indices = @transform_1, window_bounds = array<i64: 1, 128>}, {transform_indices = @transform_2, window_bounds = array<i64: 8, 128>}]} {
    %c8_i32 = arith.constant 8 : i32
    %0 = arith.muli %arg0, %c8_i32 : i32
    %c0_i32 = arith.constant 0 : i32
    %1 = arith.addi %0, %c0_i32 : i32
    %2 = arith.index_cast %1 : i32 to index
    %3 = memref.load %arg1[%2] : memref<16xi32, #tpu.memory_space<smem>>
    %c0_i32_0 = arith.constant 0 : i32
    %c0_i32_1 = arith.constant 0 : i32
    %4 = tpu.memref_slice %arg2[%3, %c0_i32_1] : memref<64x128xf32, #tpu.memory_space<any>> -> memref<1x128xf32, #tpu.memory_space<any>>
    %c0_i32_2 = arith.constant 0 : i32
    %c0_i32_3 = arith.constant 0 : i32
    %5 = tpu.memref_slice %arg5[%c0_i32_2, %c0_i32_3] : memref<8x128xf32, #tpu.memory_space<vmem>> -> memref<1x128xf32, #tpu.memory_space<vmem>>
    %6 = tpu.memref_slice %arg6[%c0_i32_0] : memref<8x!tpu.dma_semaphore, #tpu.memory_space<semaphore_mem>> -> memref<1x!tpu.dma_semaphore, #tpu.memory_space<semaphore_mem>>
    %7 = tpu.memref_squeeze %6 : memref<1x!tpu.dma_semaphore, #tpu.memory_space<semaphore_mem>> -> memref<!tpu.dma_semaphore, #tpu.memory_space<semaphore_mem>>
    tpu.enqueue_dma source(%4 : memref<1x128xf32, #tpu.memory_space<any>>) target(%5 : memref<1x128xf32, #tpu.memory_space<vmem>>) target_semaphore(%7 : memref<!tpu.dma_semaphore, #tpu.memory_space<semaphore_mem>>)
    %c8_i32_4 = arith.constant 8 : i32
    %8 = arith.muli %arg0, %c8_i32_4 : i32
    %c1_i32 = arith.constant 1 : i32
    %9 = arith.addi %8, %c1_i32 : i32
    %10 = arith.index_cast %9 : i32 to index
    %11 = memref.load %arg1[%10] : memref<16xi32, #tpu.memory_space<smem>>
    %c1_i32_5 = arith.constant 1 : i32
    %c0_i32_6 = arith.constant 0 : i32
    %12 = tpu.memref_slice %arg2[%11, %c0_i32_6] : memref<64x128xf32, #tpu.memory_space<any>> -> memref<1x128xf32, #tpu.memory_space<any>>
    %c1_i32_7 = arith.constant 1 : i32
    %c0_i32_8 = arith.constant 0 : i32
    %13 = tpu.memref_slice %arg5[%c1_i32_7, %c0_i32_8] : memref<8x128xf32, #tpu.memory_space<vmem>> -> memref<1x128xf32, #tpu.memory_space<vmem>>
    %14 = tpu.memref_slice %arg6[%c1_i32_5] : memref<8x!tpu.dma_semaphore, #tpu.memory_space<semaphore_mem>> -> memref<1x!tpu.dma_semaphore, #tpu.memory_space<semaphore_mem>>
    %15 = tpu.memref_squeeze %14 : memref<1x!tpu.dma_semaphore, #tpu.memory_space<semaphore_mem>> -> memref<!tpu.dma_semaphore, #tpu.memory_space<semaphore_mem>>
    tpu.enqueue_dma source(%12 : memref<1x128xf32, #tpu.memory_space<any>>) target(%13 : memref<1x128xf32, #tpu.memory_space<vmem>>) target_semaphore(%15 : memref<!tpu.dma_semaphore, #tpu.memory_space<semaphore_mem>>)
    %c8_i32_9 = arith.constant 8 : i32
    %16 = arith.muli %arg0, %c8_i32_9 : i32
    %c2_i32 = arith.constant 2 : i32
    %17 = arith.addi %16, %c2_i32 : i32
    %18 = arith.index_cast %17 : i32 to index
    %19 = memref.load %arg1[%18] : memref<16xi32, #tpu.memory_space<smem>>
    %c2_i32_10 = arith.constant 2 : i32
    %c0_i32_11 = arith.constant 0 : i32
    %20 = tpu.memref_slice %arg2[%19, %c0_i32_11] : memref<64x128xf32, #tpu.memory_space<any>> -> memref<1x128xf32, #tpu.memory_space<any>>
    %c2_i32_12 = arith.constant 2 : i32
    %c0_i32_13 = arith.constant 0 : i32
    %21 = tpu.memref_slice %arg5[%c2_i32_12, %c0_i32_13] : memref<8x128xf32, #tpu.memory_space<vmem>> -> memref<1x128xf32, #tpu.memory_space<vmem>>
    %22 = tpu.memref_slice %arg6[%c2_i32_10] : memref<8x!tpu.dma_semaphore, #tpu.memory_space<semaphore_mem>> -> memref<1x!tpu.dma_semaphore, #tpu.memory_space<semaphore_mem>>
    %23 = tpu.memref_squeeze %22 : memref<1x!tpu.dma_semaphore, #tpu.memory_space<semaphore_mem>> -> memref<!tpu.dma_semaphore, #tpu.memory_space<semaphore_mem>>
    tpu.enqueue_dma source(%20 : memref<1x128xf32, #tpu.memory_space<any>>) target(%21 : memref<1x128xf32, #tpu.memory_space<vmem>>) target_semaphore(%23 : memref<!tpu.dma_semaphore, #tpu.memory_space<semaphore_mem>>)
    %c8_i32_14 = arith.constant 8 : i32
    %24 = arith.muli %arg0, %c8_i32_14 : i32
    %c3_i32 = arith.constant 3 : i32
    %25 = arith.addi %24, %c3_i32 : i32
    %26 = arith.index_cast %25 : i32 to index
    %27 = memref.load %arg1[%26] : memref<16xi32, #tpu.memory_space<smem>>
    %c3_i32_15 = arith.constant 3 : i32
    %c0_i32_16 = arith.constant 0 : i32
    %28 = tpu.memref_slice %arg2[%27, %c0_i32_16] : memref<64x128xf32, #tpu.memory_space<any>> -> memref<1x128xf32, #tpu.memory_space<any>>
    %c3_i32_17 = arith.constant 3 : i32
    %c0_i32_18 = arith.constant 0 : i32
    %29 = tpu.memref_slice %arg5[%c3_i32_17, %c0_i32_18] : memref<8x128xf32, #tpu.memory_space<vmem>> -> memref<1x128xf32, #tpu.memory_space<vmem>>
    %30 = tpu.memref_slice %arg6[%c3_i32_15] : memref<8x!tpu.dma_semaphore, #tpu.memory_space<semaphore_mem>> -> memref<1x!tpu.dma_semaphore, #tpu.memory_space<semaphore_mem>>
    %31 = tpu.memref_squeeze %30 : memref<1x!tpu.dma_semaphore, #tpu.memory_space<semaphore_mem>> -> memref<!tpu.dma_semaphore, #tpu.memory_space<semaphore_mem>>
    tpu.enqueue_dma source(%28 : memref<1x128xf32, #tpu.memory_space<any>>) target(%29 : memref<1x128xf32, #tpu.memory_space<vmem>>) target_semaphore(%31 : memref<!tpu.dma_semaphore, #tpu.memory_space<semaphore_mem>>)
    %c8_i32_19 = arith.constant 8 : i32
    %32 = arith.muli %arg0, %c8_i32_19 : i32
    %c4_i32 = arith.constant 4 : i32
    %33 = arith.addi %32, %c4_i32 : i32
    %34 = arith.index_cast %33 : i32 to index
    %35 = memref.load %arg1[%34] : memref<16xi32, #tpu.memory_space<smem>>
    %c4_i32_20 = arith.constant 4 : i32
    %c0_i32_21 = arith.constant 0 : i32
    %36 = tpu.memref_slice %arg2[%35, %c0_i32_21] : memref<64x128xf32, #tpu.memory_space<any>> -> memref<1x128xf32, #tpu.memory_space<any>>
    %c4_i32_22 = arith.constant 4 : i32
    %c0_i32_23 = arith.constant 0 : i32
    %37 = tpu.memref_slice %arg5[%c4_i32_22, %c0_i32_23] : memref<8x128xf32, #tpu.memory_space<vmem>> -> memref<1x128xf32, #tpu.memory_space<vmem>>
    %38 = tpu.memref_slice %arg6[%c4_i32_20] : memref<8x!tpu.dma_semaphore, #tpu.memory_space<semaphore_mem>> -> memref<1x!tpu.dma_semaphore, #tpu.memory_space<semaphore_mem>>
    %39 = tpu.memref_squeeze %38 : memref<1x!tpu.dma_semaphore, #tpu.memory_space<semaphore_mem>> -> memref<!tpu.dma_semaphore, #tpu.memory_space<semaphore_mem>>
    tpu.enqueue_dma source(%36 : memref<1x128xf32, #tpu.memory_space<any>>) target(%37 : memref<1x128xf32, #tpu.memory_space<vmem>>) target_semaphore(%39 : memref<!tpu.dma_semaphore, #tpu.memory_space<semaphore_mem>>)
    %c8_i32_24 = arith.constant 8 : i32
    %40 = arith.muli %arg0, %c8_i32_24 : i32
    %c5_i32 = arith.constant 5 : i32
    %41 = arith.addi %40, %c5_i32 : i32
    %42 = arith.index_cast %41 : i32 to index
    %43 = memref.load %arg1[%42] : memref<16xi32, #tpu.memory_space<smem>>
    %c5_i32_25 = arith.constant 5 : i32
    %c0_i32_26 = arith.constant 0 : i32
    %44 = tpu.memref_slice %arg2[%43, %c0_i32_26] : memref<64x128xf32, #tpu.memory_space<any>> -> memref<1x128xf32, #tpu.memory_space<any>>
    %c5_i32_27 = arith.constant 5 : i32
    %c0_i32_28 = arith.constant 0 : i32
    %45 = tpu.memref_slice %arg5[%c5_i32_27, %c0_i32_28] : memref<8x128xf32, #tpu.memory_space<vmem>> -> memref<1x128xf32, #tpu.memory_space<vmem>>
    %46 = tpu.memref_slice %arg6[%c5_i32_25] : memref<8x!tpu.dma_semaphore, #tpu.memory_space<semaphore_mem>> -> memref<1x!tpu.dma_semaphore, #tpu.memory_space<semaphore_mem>>
    %47 = tpu.memref_squeeze %46 : memref<1x!tpu.dma_semaphore, #tpu.memory_space<semaphore_mem>> -> memref<!tpu.dma_semaphore, #tpu.memory_space<semaphore_mem>>
    tpu.enqueue_dma source(%44 : memref<1x128xf32, #tpu.memory_space<any>>) target(%45 : memref<1x128xf32, #tpu.memory_space<vmem>>) target_semaphore(%47 : memref<!tpu.dma_semaphore, #tpu.memory_space<semaphore_mem>>)
    %c8_i32_29 = arith.constant 8 : i32
    %48 = arith.muli %arg0, %c8_i32_29 : i32
    %c6_i32 = arith.constant 6 : i32
    %49 = arith.addi %48, %c6_i32 : i32
    %50 = arith.index_cast %49 : i32 to index
    %51 = memref.load %arg1[%50] : memref<16xi32, #tpu.memory_space<smem>>
    %c6_i32_30 = arith.constant 6 : i32
    %c0_i32_31 = arith.constant 0 : i32
    %52 = tpu.memref_slice %arg2[%51, %c0_i32_31] : memref<64x128xf32, #tpu.memory_space<any>> -> memref<1x128xf32, #tpu.memory_space<any>>
    %c6_i32_32 = arith.constant 6 : i32
    %c0_i32_33 = arith.constant 0 : i32
    %53 = tpu.memref_slice %arg5[%c6_i32_32, %c0_i32_33] : memref<8x128xf32, #tpu.memory_space<vmem>> -> memref<1x128xf32, #tpu.memory_space<vmem>>
    %54 = tpu.memref_slice %arg6[%c6_i32_30] : memref<8x!tpu.dma_semaphore, #tpu.memory_space<semaphore_mem>> -> memref<1x!tpu.dma_semaphore, #tpu.memory_space<semaphore_mem>>
    %55 = tpu.memref_squeeze %54 : memref<1x!tpu.dma_semaphore, #tpu.memory_space<semaphore_mem>> -> memref<!tpu.dma_semaphore, #tpu.memory_space<semaphore_mem>>
    tpu.enqueue_dma source(%52 : memref<1x128xf32, #tpu.memory_space<any>>) target(%53 : memref<1x128xf32, #tpu.memory_space<vmem>>) target_semaphore(%55 : memref<!tpu.dma_semaphore, #tpu.memory_space<semaphore_mem>>)
    %c8_i32_34 = arith.constant 8 : i32
    %56 = arith.muli %arg0, %c8_i32_34 : i32
    %c7_i32 = arith.constant 7 : i32
    %57 = arith.addi %56, %c7_i32 : i32
    %58 = arith.index_cast %57 : i32 to index
    %59 = memref.load %arg1[%58] : memref<16xi32, #tpu.memory_space<smem>>
    %c7_i32_35 = arith.constant 7 : i32
    %c0_i32_36 = arith.constant 0 : i32
    %60 = tpu.memref_slice %arg2[%59, %c0_i32_36] : memref<64x128xf32, #tpu.memory_space<any>> -> memref<1x128xf32, #tpu.memory_space<any>>
    %c7_i32_37 = arith.constant 7 : i32
    %c0_i32_38 = arith.constant 0 : i32
    %61 = tpu.memref_slice %arg5[%c7_i32_37, %c0_i32_38] : memref<8x128xf32, #tpu.memory_space<vmem>> -> memref<1x128xf32, #tpu.memory_space<vmem>>
    %62 = tpu.memref_slice %arg6[%c7_i32_35] : memref<8x!tpu.dma_semaphore, #tpu.memory_space<semaphore_mem>> -> memref<1x!tpu.dma_semaphore, #tpu.memory_space<semaphore_mem>>
    %63 = tpu.memref_squeeze %62 : memref<1x!tpu.dma_semaphore, #tpu.memory_space<semaphore_mem>> -> memref<!tpu.dma_semaphore, #tpu.memory_space<semaphore_mem>>
    tpu.enqueue_dma source(%60 : memref<1x128xf32, #tpu.memory_space<any>>) target(%61 : memref<1x128xf32, #tpu.memory_space<vmem>>) target_semaphore(%63 : memref<!tpu.dma_semaphore, #tpu.memory_space<semaphore_mem>>)
    %c0_i32_39 = arith.constant 0 : i32
    %c0_i32_40 = arith.constant 0 : i32
    %64 = tpu.memref_slice %arg2[%3, %c0_i32_40] : memref<64x128xf32, #tpu.memory_space<any>> -> memref<1x128xf32, #tpu.memory_space<any>>
    %c0_i32_41 = arith.constant 0 : i32
    %c0_i32_42 = arith.constant 0 : i32
    %65 = tpu.memref_slice %arg5[%c0_i32_41, %c0_i32_42] : memref<8x128xf32, #tpu.memory_space<vmem>> -> memref<1x128xf32, #tpu.memory_space<vmem>>
    %66 = tpu.memref_slice %arg6[%c0_i32_39] : memref<8x!tpu.dma_semaphore, #tpu.memory_space<semaphore_mem>> -> memref<1x!tpu.dma_semaphore, #tpu.memory_space<semaphore_mem>>
    %67 = tpu.memref_squeeze %66 : memref<1x!tpu.dma_semaphore, #tpu.memory_space<semaphore_mem>> -> memref<!tpu.dma_semaphore, #tpu.memory_space<semaphore_mem>>
    tpu.wait_dma2 semaphore(%67 : memref<!tpu.dma_semaphore, #tpu.memory_space<semaphore_mem>>) src(%64 : memref<1x128xf32, #tpu.memory_space<any>>) dst(%65 : memref<1x128xf32, #tpu.memory_space<vmem>>)
    %c1_i32_43 = arith.constant 1 : i32
    %c0_i32_44 = arith.constant 0 : i32
    %68 = tpu.memref_slice %arg2[%11, %c0_i32_44] : memref<64x128xf32, #tpu.memory_space<any>> -> memref<1x128xf32, #tpu.memory_space<any>>
    %c1_i32_45 = arith.constant 1 : i32
    %c0_i32_46 = arith.constant 0 : i32
    %69 = tpu.memref_slice %arg5[%c1_i32_45, %c0_i32_46] : memref<8x128xf32, #tpu.memory_space<vmem>> -> memref<1x128xf32, #tpu.memory_space<vmem>>
    %70 = tpu.memref_slice %arg6[%c1_i32_43] : memref<8x!tpu.dma_semaphore, #tpu.memory_space<semaphore_mem>> -> memref<1x!tpu.dma_semaphore, #tpu.memory_space<semaphore_mem>>
    %71 = tpu.memref_squeeze %70 : memref<1x!tpu.dma_semaphore, #tpu.memory_space<semaphore_mem>> -> memref<!tpu.dma_semaphore, #tpu.memory_space<semaphore_mem>>
    tpu.wait_dma2 semaphore(%71 : memref<!tpu.dma_semaphore, #tpu.memory_space<semaphore_mem>>) src(%68 : memref<1x128xf32, #tpu.memory_space<any>>) dst(%69 : memref<1x128xf32, #tpu.memory_space<vmem>>)
    %c2_i32_47 = arith.constant 2 : i32
    %c0_i32_48 = arith.constant 0 : i32
    %72 = tpu.memref_slice %arg2[%19, %c0_i32_48] : memref<64x128xf32, #tpu.memory_space<any>> -> memref<1x128xf32, #tpu.memory_space<any>>
    %c2_i32_49 = arith.constant 2 : i32
    %c0_i32_50 = arith.constant 0 : i32
    %73 = tpu.memref_slice %arg5[%c2_i32_49, %c0_i32_50] : memref<8x128xf32, #tpu.memory_space<vmem>> -> memref<1x128xf32, #tpu.memory_space<vmem>>
    %74 = tpu.memref_slice %arg6[%c2_i32_47] : memref<8x!tpu.dma_semaphore, #tpu.memory_space<semaphore_mem>> -> memref<1x!tpu.dma_semaphore, #tpu.memory_space<semaphore_mem>>
    %75 = tpu.memref_squeeze %74 : memref<1x!tpu.dma_semaphore, #tpu.memory_space<semaphore_mem>> -> memref<!tpu.dma_semaphore, #tpu.memory_space<semaphore_mem>>
    tpu.wait_dma2 semaphore(%75 : memref<!tpu.dma_semaphore, #tpu.memory_space<semaphore_mem>>) src(%72 : memref<1x128xf32, #tpu.memory_space<any>>) dst(%73 : memref<1x128xf32, #tpu.memory_space<vmem>>)
    %c3_i32_51 = arith.constant 3 : i32
    %c0_i32_52 = arith.constant 0 : i32
    %76 = tpu.memref_slice %arg2[%27, %c0_i32_52] : memref<64x128xf32, #tpu.memory_space<any>> -> memref<1x128xf32, #tpu.memory_space<any>>
    %c3_i32_53 = arith.constant 3 : i32
    %c0_i32_54 = arith.constant 0 : i32
    %77 = tpu.memref_slice %arg5[%c3_i32_53, %c0_i32_54] : memref<8x128xf32, #tpu.memory_space<vmem>> -> memref<1x128xf32, #tpu.memory_space<vmem>>
    %78 = tpu.memref_slice %arg6[%c3_i32_51] : memref<8x!tpu.dma_semaphore, #tpu.memory_space<semaphore_mem>> -> memref<1x!tpu.dma_semaphore, #tpu.memory_space<semaphore_mem>>
    %79 = tpu.memref_squeeze %78 : memref<1x!tpu.dma_semaphore, #tpu.memory_space<semaphore_mem>> -> memref<!tpu.dma_semaphore, #tpu.memory_space<semaphore_mem>>
    tpu.wait_dma2 semaphore(%79 : memref<!tpu.dma_semaphore, #tpu.memory_space<semaphore_mem>>) src(%76 : memref<1x128xf32, #tpu.memory_space<any>>) dst(%77 : memref<1x128xf32, #tpu.memory_space<vmem>>)
    %c4_i32_55 = arith.constant 4 : i32
    %c0_i32_56 = arith.constant 0 : i32
    %80 = tpu.memref_slice %arg2[%35, %c0_i32_56] : memref<64x128xf32, #tpu.memory_space<any>> -> memref<1x128xf32, #tpu.memory_space<any>>
    %c4_i32_57 = arith.constant 4 : i32
    %c0_i32_58 = arith.constant 0 : i32
    %81 = tpu.memref_slice %arg5[%c4_i32_57, %c0_i32_58] : memref<8x128xf32, #tpu.memory_space<vmem>> -> memref<1x128xf32, #tpu.memory_space<vmem>>
    %82 = tpu.memref_slice %arg6[%c4_i32_55] : memref<8x!tpu.dma_semaphore, #tpu.memory_space<semaphore_mem>> -> memref<1x!tpu.dma_semaphore, #tpu.memory_space<semaphore_mem>>
    %83 = tpu.memref_squeeze %82 : memref<1x!tpu.dma_semaphore, #tpu.memory_space<semaphore_mem>> -> memref<!tpu.dma_semaphore, #tpu.memory_space<semaphore_mem>>
    tpu.wait_dma2 semaphore(%83 : memref<!tpu.dma_semaphore, #tpu.memory_space<semaphore_mem>>) src(%80 : memref<1x128xf32, #tpu.memory_space<any>>) dst(%81 : memref<1x128xf32, #tpu.memory_space<vmem>>)
    %c5_i32_59 = arith.constant 5 : i32
    %c0_i32_60 = arith.constant 0 : i32
    %84 = tpu.memref_slice %arg2[%43, %c0_i32_60] : memref<64x128xf32, #tpu.memory_space<any>> -> memref<1x128xf32, #tpu.memory_space<any>>
    %c5_i32_61 = arith.constant 5 : i32
    %c0_i32_62 = arith.constant 0 : i32
    %85 = tpu.memref_slice %arg5[%c5_i32_61, %c0_i32_62] : memref<8x128xf32, #tpu.memory_space<vmem>> -> memref<1x128xf32, #tpu.memory_space<vmem>>
    %86 = tpu.memref_slice %arg6[%c5_i32_59] : memref<8x!tpu.dma_semaphore, #tpu.memory_space<semaphore_mem>> -> memref<1x!tpu.dma_semaphore, #tpu.memory_space<semaphore_mem>>
    %87 = tpu.memref_squeeze %86 : memref<1x!tpu.dma_semaphore, #tpu.memory_space<semaphore_mem>> -> memref<!tpu.dma_semaphore, #tpu.memory_space<semaphore_mem>>
    tpu.wait_dma2 semaphore(%87 : memref<!tpu.dma_semaphore, #tpu.memory_space<semaphore_mem>>) src(%84 : memref<1x128xf32, #tpu.memory_space<any>>) dst(%85 : memref<1x128xf32, #tpu.memory_space<vmem>>)
    %c6_i32_63 = arith.constant 6 : i32
    %c0_i32_64 = arith.constant 0 : i32
    %88 = tpu.memref_slice %arg2[%51, %c0_i32_64] : memref<64x128xf32, #tpu.memory_space<any>> -> memref<1x128xf32, #tpu.memory_space<any>>
    %c6_i32_65 = arith.constant 6 : i32
    %c0_i32_66 = arith.constant 0 : i32
    %89 = tpu.memref_slice %arg5[%c6_i32_65, %c0_i32_66] : memref<8x128xf32, #tpu.memory_space<vmem>> -> memref<1x128xf32, #tpu.memory_space<vmem>>
    %90 = tpu.memref_slice %arg6[%c6_i32_63] : memref<8x!tpu.dma_semaphore, #tpu.memory_space<semaphore_mem>> -> memref<1x!tpu.dma_semaphore, #tpu.memory_space<semaphore_mem>>
    %91 = tpu.memref_squeeze %90 : memref<1x!tpu.dma_semaphore, #tpu.memory_space<semaphore_mem>> -> memref<!tpu.dma_semaphore, #tpu.memory_space<semaphore_mem>>
    tpu.wait_dma2 semaphore(%91 : memref<!tpu.dma_semaphore, #tpu.memory_space<semaphore_mem>>) src(%88 : memref<1x128xf32, #tpu.memory_space<any>>) dst(%89 : memref<1x128xf32, #tpu.memory_space<vmem>>)
    %c7_i32_67 = arith.constant 7 : i32
    %c0_i32_68 = arith.constant 0 : i32
    %92 = tpu.memref_slice %arg2[%59, %c0_i32_68] : memref<64x128xf32, #tpu.memory_space<any>> -> memref<1x128xf32, #tpu.memory_space<any>>
    %c7_i32_69 = arith.constant 7 : i32
    %c0_i32_70 = arith.constant 0 : i32
    %93 = tpu.memref_slice %arg5[%c7_i32_69, %c0_i32_70] : memref<8x128xf32, #tpu.memory_space<vmem>> -> memref<1x128xf32, #tpu.memory_space<vmem>>
    %94 = tpu.memref_slice %arg6[%c7_i32_67] : memref<8x!tpu.dma_semaphore, #tpu.memory_space<semaphore_mem>> -> memref<1x!tpu.dma_semaphore, #tpu.memory_space<semaphore_mem>>
    %95 = tpu.memref_squeeze %94 : memref<1x!tpu.dma_semaphore, #tpu.memory_space<semaphore_mem>> -> memref<!tpu.dma_semaphore, #tpu.memory_space<semaphore_mem>>
    tpu.wait_dma2 semaphore(%95 : memref<!tpu.dma_semaphore, #tpu.memory_space<semaphore_mem>>) src(%92 : memref<1x128xf32, #tpu.memory_space<any>>) dst(%93 : memref<1x128xf32, #tpu.memory_space<vmem>>)
    %c0 = arith.constant 0 : index
    %c0_71 = arith.constant 0 : index
    %96 = vector.load %arg5[%c0, %c0_71] : memref<8x128xf32, #tpu.memory_space<vmem>>, vector<8x128xf32>
    %c0_72 = arith.constant 0 : index
    %c0_73 = arith.constant 0 : index
    %97 = vector.load %arg3[%c0_72, %c0_73] : memref<1x128xf32, #tpu.memory_space<vmem>>, vector<1x128xf32>
    %98 = vector.broadcast %97 : vector<1x128xf32> to vector<8x128xf32>
    %99 = arith.addf %96, %98 : vector<8x128xf32>
    %c0_74 = arith.constant 0 : index
    %c0_75 = arith.constant 0 : index
    %100 = vector.load %arg4[%c0_74, %c0_75] : memref<8x128xf32, #tpu.memory_space<vmem>>, vector<8x128xf32>
    tpu.vector_store %arg4[%c0_74, %c0_75], %99 {strides = array<i32>} : memref<8x128xf32, #tpu.memory_space<vmem>>, vector<8x128xf32>,
    return
  }
  func.func @transform_1(%arg0: i32, %arg1: memref<16xi32, #tpu.memory_space<smem>>) -> (i32, i32) {
    %c0_i32 = arith.constant 0 : i32
    %c0_i32_0 = arith.constant 0 : i32
    %c0_i32_1 = arith.constant 0 : i32
    return %c0_i32, %c0_i32_0 : i32, i32
  }
  func.func @transform_2(%arg0: i32, %arg1: memref<16xi32, #tpu.memory_space<smem>>) -> (i32, i32) {
    %c0_i32 = arith.constant 0 : i32
    %c0_i32_0 = arith.constant 0 : i32
    return %arg0, %c0_i32 : i32, i32
  }
}

</mosaic_0001>

<llo_original>
// kernel: tpu_custom_call.1
$region0: #{tpu_custom_call.1}
  #allocation0 [shape = 'u32[]', space=smem, size = 0x4, offset = 0x4, fixed_abs, tag = 'smem constant byte address 0x4 - core index']
  #allocation1 [shape = 'u32[144,128]{1,0:T(1,128)}', space=vmem, size = 0x12000, scoped, tag = 'internal scratch']
  #allocation2 [shape = 'f32[8,128]{1,0:T(8,128)}', space=vmem, size = 0x1000, scoped, tag = 'scratch operand']
  #allocation3 [shape = 's32[8]{0}', space=sflag, size = 0x20, scoped, tag = 'scratch operand']
  #allocation4 [shape = 's32[1]{0}', space=sflag, size = 0x4, scoped, tag = 'scoped memory for tpu_custom_call.1']
  #allocation5 [shape = 'u8[512]{0}', space=smem, size = 0x200, scoped, tag = 'prefetched SMEM operand 0']
  #allocation8 [shape = 's32[]', space=sflag, size = 0x4, offset = 0, fixed_abs, tag = 'sflag constant byte address 0x0 - dummy sync flag']
  #allocation9 [shape = 's32[]', space=sflag, size = 0x4, offset = 0, fixed_abs, tag = 'sflag constant byte address 0x0 - dummy sync flag']
  #allocation10 [shape = 'u32[]', space=smem, size = 0x4, offset = 0x44, fixed_abs, tag = 'smem constant byte address 0x44 - assertion arg 0']
  #allocation11 [shape = 'u32[]', space=smem, size = 0x4, offset = 0x48, fixed_abs, tag = 'smem constant byte address 0x48 - assertion arg 1']
  #allocation12 [shape = 's32[]', space=sflag, size = 0x4, offset = 0, fixed_abs, tag = 'sflag constant byte address 0x0 - dummy sync flag']
  #allocation13 [shape = 's32[]', space=sflag, size = 0x4, offset = 0, fixed_abs, tag = 'sflag constant byte address 0x0 - dummy sync flag']
  #allocation14 [shape = 's32[]', space=sflag, size = 0x4, offset = 0, fixed_abs, tag = 'sflag constant byte address 0x0 - dummy sync flag']
  #allocation15 [shape = 's32[]', space=sflag, size = 0x4, offset = 0, fixed_abs, tag = 'sflag constant byte address 0x0 - dummy sync flag']
  #allocation16 [shape = 's32[]', space=sflag, size = 0x4, offset = 0, fixed_abs, tag = 'sflag constant byte address 0x0 - dummy sync flag']
  #allocation17 [shape = 's32[]', space=sflag, size = 0x4, offset = 0, fixed_abs, tag = 'sflag constant byte address 0x0 - dummy sync flag']
  #allocation18 [shape = 's32[]', space=sflag, size = 0x4, offset = 0, fixed_abs, tag = 'sflag constant byte address 0x0 - dummy sync flag']
  #allocation19 [shape = 's32[]', space=sflag, size = 0x4, offset = 0, fixed_abs, tag = 'sflag constant byte address 0x0 - dummy sync flag']
  #allocation20 [shape = 's32[]', space=sflag, size = 0x4, offset = 0, fixed_abs, tag = 'sflag constant byte address 0x0 - dummy sync flag']
  #allocation21 [shape = 's32[]', space=sflag, size = 0x4, offset = 0, fixed_abs, tag = 'sflag constant byte address 0x0 - dummy sync flag']
  #allocation22 [shape = 's32[]', space=sflag, size = 0x4, offset = 0, fixed_abs, tag = 'sflag constant byte address 0x0 - dummy sync flag']
  #allocation23 [shape = 's32[]', space=sflag, size = 0x4, offset = 0, fixed_abs, tag = 'sflag constant byte address 0x0 - dummy sync flag']
  #allocation24 [shape = 's32[]', space=sflag, size = 0x4, offset = 0, fixed_abs, tag = 'sflag constant byte address 0x0 - dummy sync flag']
  #allocation25 [shape = 's32[]', space=sflag, size = 0x4, offset = 0, fixed_abs, tag = 'sflag constant byte address 0x0 - dummy sync flag']
  %s0 = inlined_call_operand.hbm [shape: s32[16], index: 0, kind: input, shape index: {}]
  %s1 = inlined_call_operand.hbm [shape: f32[64,128], index: 1, kind: input, shape index: {}]
  %s2 = inlined_call_operand.vmem [shape: f32[1,128], index: 2, kind: input, shape index: {}]
  %s3 = inlined_call_operand.hbm [shape: f32[16,128], index: 3, kind: output, shape index: {}]
  %s4 = sld [smem:[#allocation0]]
  $region69: #{tpu_custom_call.1} parent=0
    _
  %s6 = ssub.s32 1, %s4
  %s7 = scalar_select 0, %s6, %s4
  %9 = dma.hbm_to_smem %s0, 16, [#allocation5], [#allocation4]
  %10 = dma.done [#allocation4], 16
  %11 = sfence
  $region1: #{tpu_custom_call.1} parent=0
    #allocation6 [shape = 'u8[8192]{0}', space=vmem, size = 0x2000, scoped, tag = 'output window, operand 0']
    #allocation7 [shape = 's32[2]{0}', space=sflag, size = 0x8, scoped, tag = 'scoped memory for tpu_custom_call.1']
    %12 = vsyncpa [#allocation7], 0
    %s13 = scalar_lea.sflag [#allocation7], 1
    %14 = vsyncpa %s13, 0
    loop: start=0, step=1, limit=4
    $region2: #{tpu_custom_call.1} parent=1 // loop_pre_header
      _
    $region3: #{tpu_custom_call.1} parent=1 // loop_header
      %s16 = sphi 0, %s20
      %p17 = scmp.ge.s32.totalorder %s16, 4
      %s24 = sphi 0, %s24
      %s26 = sphi 0, %s24
      %s27 = sphi 0, %s26
      %s41 = sphi 0, %s27
      %s47 = sphi 0, %s49
      %s50 = sphi 0, %s47
      %s51 = sphi 0, %s50
      %s67 = sphi 0, %s51
    $region4: #{tpu_custom_call.1} parent=1 // loop_header_branch
      %19 = sbr.rel (%p17) target = $region8
    $region5: #{tpu_custom_call.1} parent=1 // loop_body
      %s21 = ssub.s32 %s16, 1
      %s22 = ssub.s32 %s16, 2
      %s23 = sadd.s32 %s16, 1
      %s25 = sadd.s32 %s24, 1
      %p28 = scmp.eq.s32.totalorder %s16, 1
      %p29 = scmp.ne.s32.totalorder %s24, %s26
      %p30 = scmp.eq.s32.totalorder %s16, 0
      %p31 = por %p29, %p30
      %p32 = scmp.ne.s32.totalorder %s24, %s26
      %p33 = scmp.eq.s32.totalorder %s21, 1
      %p34 = por %p32, %p33
      %p35 = scmp.ne.s32.totalorder %s26, %s27
      %p36 = scmp.eq.s32.totalorder %s21, 0
      %p37 = por %p35, %p36
      %p38 = scmp.ne.s32.totalorder %s26, %s27
      %p39 = scmp.eq.s32.totalorder %s22, 1
      %p40 = por %p38, %p39
      %p42 = scmp.ne.s32.totalorder %s27, %s41
      %p43 = scmp.eq.s32.totalorder %s22, 0
      %p44 = por %p42, %p43
      %s45 = ssub.s32 %s16, %s23
      %p46 = scmp.eq.s32.totalorder %s45, 0
      %s48 = sadd.s32 %s47, 1
      %s49 = scalar_select %p46, %s47, %s48
      %p52 = pneg %p46
      %p53 = scmp.eq.s32.totalorder %s16, 1
      %p54 = por %p52, %p53
      %p55 = scmp.ne.s32.totalorder %s47, %s50
      %p56 = scmp.eq.s32.totalorder %s16, 0
      %p57 = por %p55, %p56
      %p58 = scmp.ne.s32.totalorder %s47, %s50
      %p59 = scmp.eq.s32.totalorder %s21, 1
      %p60 = por %p58, %p59
      %p61 = scmp.ne.s32.totalorder %s50, %s51
      %p62 = scmp.eq.s32.totalorder %s21, 0
      %p63 = por %p61, %p62
      %p64 = scmp.ne.s32.totalorder %s50, %s51
      %p65 = scmp.eq.s32.totalorder %s22, 1
      %p66 = por %p64, %p65
      %p68 = scmp.ne.s32.totalorder %s51, %s67
      %p69 = scmp.eq.s32.totalorder %s22, 0
      %p70 = por %p68, %p69
      %p71 = scmp.le.s32.totalorder 1, %s16
      %p72 = scmp.lt.s32.totalorder %s16, 3
      %p73 = pnand %p71, %p72
      %p74 = pneg %p73
      // Predicated region
      $region9: #{tpu_custom_call.1} parent=5 // pred_check
        _
      $region10: #{tpu_custom_call.1} parent=5 // pred_check_branch
        %76 = sbr.rel (%p73) target = $region12
      $region11: #{tpu_custom_call.1} parent=5 // pred_region
        %s77 = ssub.s32 %s16, 1
        // Predicated region
        $region13: #{tpu_custom_call.1} parent=11 // pred_check
          %p78 = pneg %p37
        $region14: #{tpu_custom_call.1} parent=11 // pred_check_branch
          %80 = sbr.rel (%p78) target = $region16
        $region15: #{tpu_custom_call.1} parent=11 // pred_region
          _
        $region16: #{tpu_custom_call.1} parent=11 // pred_fallthru
          _
      $region12: #{tpu_custom_call.1} parent=5 // pred_fallthru
        _
      %p81 = scmp.lt.s32.totalorder %s16, 2
      // Predicated region
      $region17: #{tpu_custom_call.1} parent=5 // pred_check
        %p82 = pneg %p81
      $region18: #{tpu_custom_call.1} parent=5 // pred_check_branch
        %84 = sbr.rel (%p82) target = $region20
      $region19: #{tpu_custom_call.1} parent=5 // pred_region
        _
      $region20: #{tpu_custom_call.1} parent=5 // pred_fallthru
        _
      %p85 = scmp.le.s32.totalorder 1, %s16
      %p86 = scmp.lt.s32.totalorder %s16, 3
      %p87 = pnand %p85, %p86
      %p88 = pneg %p87
      // Predicated region
      $region21: #{tpu_custom_call.1} parent=5 // pred_check
        _
      $region22: #{tpu_custom_call.1} parent=5 // pred_check_branch
        %90 = sbr.rel (%p87) target = $region24
      $region23: #{tpu_custom_call.1} parent=5 // pred_region
        %s91 = ssub.s32 %s16, 1
        %p92 = pneg %p37
        %p93 = pneg %p34
        %p94 = pneg %p63
        %p95 = pneg %p60
        %s96 = sand.u32 %s50, 1
        %s97 = scalar_lea.sflag [#allocation7], %s96
        %s98 = sand.u32 %s50, 1
        %s99 = smul.addr %s98, 8
        %s100 = scalar_lea.vmem [#allocation6], %s99
        %s101 = smul.u32 %s21, 8
        %s102 = sld [smem:[#allocation5 + %s101]]
        %s103 = smul.addr %s102, 16
        %s104 = scalar_lea.hbm %s1, %s103
        // Predicated region
        $region25: #{tpu_custom_call.1} parent=23 // pred_check
          _
        $region26: #{tpu_custom_call.1} parent=23 // pred_check_branch
          %106 = sbr.rel target = $region28
        $region27: #{tpu_custom_call.1} parent=23 // pred_region
          %107 = sst [smem:[#allocation10]] [#allocation9]
          %108 = sst [smem:[#allocation11]] [#allocation8]
        $region28: #{tpu_custom_call.1} parent=23 // pred_fallthru
          _
        %110 = shalt.err (0)
        %s112 = sshll.u32 [#allocation2], 4
        %s113 = int_to_ptr.vmem [resolvable:$true] %s112
        %115 = dma.hbm_to_vmem [thread:$0]  %s104, 16, %s113, [#allocation3]
        %s116 = sadd.s32 %s101, 1
        %s117 = sld [smem:[#allocation5 + %s116]]
        %s118 = smul.addr %s117, 16
        %s119 = scalar_lea.hbm %s1, %s118
        %s120 = scalar_lea.vmem [#allocation2], 1
        %s121 = scalar_lea.sflag [#allocation3], 1
        // Predicated region
        $region29: #{tpu_custom_call.1} parent=23 // pred_check
          _
        $region30: #{tpu_custom_call.1} parent=23 // pred_check_branch
          %123 = sbr.rel target = $region32
        $region31: #{tpu_custom_call.1} parent=23 // pred_region
          %124 = sst [smem:[#allocation10]] [#allocation13]
          %125 = sst [smem:[#allocation11]] [#allocation12]
        $region32: #{tpu_custom_call.1} parent=23 // pred_fallthru
          _
        %127 = shalt.err (0)
        %s129 = sshll.u32 %s120, 4
        %s130 = int_to_ptr.vmem [resolvable:$true] %s129
        %132 = dma.hbm_to_vmem [thread:$0]  %s119, 16, %s130, %s121
        %s133 = sadd.s32 %s101, 2
        %s134 = sld [smem:[#allocation5 + %s133]]
        %s135 = smul.addr %s134, 16
        %s136 = scalar_lea.hbm %s1, %s135
        %s137 = scalar_lea.vmem [#allocation2], 2
        %s138 = scalar_lea.sflag [#allocation3], 2
        // Predicated region
        $region33: #{tpu_custom_call.1} parent=23 // pred_check
          _
        $region34: #{tpu_custom_call.1} parent=23 // pred_check_branch
          %140 = sbr.rel target = $region36
        $region35: #{tpu_custom_call.1} parent=23 // pred_region
          %141 = sst [smem:[#allocation10]] [#allocation15]
          %142 = sst [smem:[#allocation11]] [#allocation14]
        $region36: #{tpu_custom_call.1} parent=23 // pred_fallthru
          _
        %144 = shalt.err (0)
        %s146 = sshll.u32 %s137, 4
        %s147 = int_to_ptr.vmem [resolvable:$true] %s146
        %149 = dma.hbm_to_vmem [thread:$0]  %s136, 16, %s147, %s138
        %s150 = sadd.s32 %s101, 3
        %s151 = sld [smem:[#allocation5 + %s150]]
        %s152 = smul.addr %s151, 16
        %s153 = scalar_lea.hbm %s1, %s152
        %s154 = scalar_lea.vmem [#allocation2], 3
        %s155 = scalar_lea.sflag [#allocation3], 3
        // Predicated region
        $region37: #{tpu_custom_call.1} parent=23 // pred_check
          _
        $region38: #{tpu_custom_call.1} parent=23 // pred_check_branch
          %157 = sbr.rel target = $region40
        $region39: #{tpu_custom_call.1} parent=23 // pred_region
          %158 = sst [smem:[#allocation10]] [#allocation17]
          %159 = sst [smem:[#allocation11]] [#allocation16]
        $region40: #{tpu_custom_call.1} parent=23 // pred_fallthru
          _
        %161 = shalt.err (0)
        %s163 = sshll.u32 %s154, 4
        %s164 = int_to_ptr.vmem [resolvable:$true] %s163
        %166 = dma.hbm_to_vmem [thread:$0]  %s153, 16, %s164, %s155
        %s167 = sadd.s32 %s101, 4
        %s168 = sld [smem:[#allocation5 + %s167]]
        %s169 = smul.addr %s168, 16
        %s170 = scalar_lea.hbm %s1, %s169
        %s171 = scalar_lea.vmem [#allocation2], 4
        %s172 = scalar_lea.sflag [#allocation3], 4
        // Predicated region
        $region41: #{tpu_custom_call.1} parent=23 // pred_check
          _
        $region42: #{tpu_custom_call.1} parent=23 // pred_check_branch
          %174 = sbr.rel target = $region44
        $region43: #{tpu_custom_call.1} parent=23 // pred_region
          %175 = sst [smem:[#allocation10]] [#allocation19]
          %176 = sst [smem:[#allocation11]] [#allocation18]
        $region44: #{tpu_custom_call.1} parent=23 // pred_fallthru
          _
        %178 = shalt.err (0)
        %s180 = sshll.u32 %s171, 4
        %s181 = int_to_ptr.vmem [resolvable:$true] %s180
        %183 = dma.hbm_to_vmem [thread:$0]  %s170, 16, %s181, %s172
        %s184 = sadd.s32 %s101, 5
        %s185 = sld [smem:[#allocation5 + %s184]]
        %s186 = smul.addr %s185, 16
        %s187 = scalar_lea.hbm %s1, %s186
        %s188 = scalar_lea.vmem [#allocation2], 5
        %s189 = scalar_lea.sflag [#allocation3], 5
        // Predicated region
        $region45: #{tpu_custom_call.1} parent=23 // pred_check
          _
        $region46: #{tpu_custom_call.1} parent=23 // pred_check_branch
          %191 = sbr.rel target = $region48
        $region47: #{tpu_custom_call.1} parent=23 // pred_region
          %192 = sst [smem:[#allocation10]] [#allocation21]
          %193 = sst [smem:[#allocation11]] [#allocation20]
        $region48: #{tpu_custom_call.1} parent=23 // pred_fallthru
          _
        %195 = shalt.err (0)
        %s197 = sshll.u32 %s188, 4
        %s198 = int_to_ptr.vmem [resolvable:$true] %s197
        %200 = dma.hbm_to_vmem [thread:$0]  %s187, 16, %s198, %s189
        %s201 = sadd.s32 %s101, 6
        %s202 = sld [smem:[#allocation5 + %s201]]
        %s203 = smul.addr %s202, 16
        %s204 = scalar_lea.hbm %s1, %s203
        %s205 = scalar_lea.vmem [#allocation2], 6
        %s206 = scalar_lea.sflag [#allocation3], 6
        // Predicated region
        $region49: #{tpu_custom_call.1} parent=23 // pred_check
          _
        $region50: #{tpu_custom_call.1} parent=23 // pred_check_branch
          %208 = sbr.rel target = $region52
        $region51: #{tpu_custom_call.1} parent=23 // pred_region
          %209 = sst [smem:[#allocation10]] [#allocation23]
          %210 = sst [smem:[#allocation11]] [#allocation22]
        $region52: #{tpu_custom_call.1} parent=23 // pred_fallthru
          _
        %212 = shalt.err (0)
        %s214 = sshll.u32 %s205, 4
        %s215 = int_to_ptr.vmem [resolvable:$true] %s214
        %217 = dma.hbm_to_vmem [thread:$0]  %s204, 16, %s215, %s206
        %s218 = sadd.s32 %s101, 7
        %s219 = sld [smem:[#allocation5 + %s218]]
        %s220 = smul.addr %s219, 16
        %s221 = scalar_lea.hbm %s1, %s220
        %s222 = scalar_lea.vmem [#allocation2], 7
        %s223 = scalar_lea.sflag [#allocation3], 7
        // Predicated region
        $region53: #{tpu_custom_call.1} parent=23 // pred_check
          _
        $region54: #{tpu_custom_call.1} parent=23 // pred_check_branch
          %225 = sbr.rel target = $region56
        $region55: #{tpu_custom_call.1} parent=23 // pred_region
          %226 = sst [smem:[#allocation10]] [#allocation25]
          %227 = sst [smem:[#allocation11]] [#allocation24]
        $region56: #{tpu_custom_call.1} parent=23 // pred_fallthru
          _
        %229 = shalt.err (0)
        %s231 = sshll.u32 %s222, 4
        %s232 = int_to_ptr.vmem [resolvable:$true] %s231
        %234 = dma.hbm_to_vmem [thread:$0]  %s221, 16, %s232, %s223
        %s235 = smul.u32 1, 1
        %s236 = sshll.u32 %s235, 4
        %237 = dma.done [#allocation3], %s236
        %s238 = sshll.u32 %s235, 4
        %239 = dma.done %s121, %s238
        %s240 = sshll.u32 %s235, 4
        %241 = dma.done %s138, %s240
        %s242 = sshll.u32 %s235, 4
        %243 = dma.done %s155, %s242
        %s244 = sshll.u32 %s235, 4
        %245 = dma.done %s172, %s244
        %s246 = sshll.u32 %s235, 4
        %247 = dma.done %s189, %s246
        %s248 = sshll.u32 %s235, 4
        %249 = dma.done %s206, %s248
        %s250 = sshll.u32 %s235, 4
        %251 = dma.done %s223, %s250
        %v252 = vld [vmem:[#allocation2] sm:$0xff]
        %v253 = vld [vmem:[%s2] sm:$0x1]
        %v255 = vlaneseq
        %v256 = vshrl.u32 %v255, 7
        %v257 = vsub.s32 0, %v256
        %v258 = vrot.slane %v253, %v257
        %v260 = vadd.f32 %v252, %v258
        %261 = vst [vmem:[%s100] sm:$0xff] %v260
        %s262 = sand.u32 %s50, 1
        %s263 = scalar_lea.sflag [#allocation7], %s262
        %s264 = sand.u32 %s50, 1
        %s265 = smul.addr %s264, 8
        %s266 = scalar_lea.vmem [#allocation6], %s265
        // Predicated region
        $region57: #{tpu_custom_call.1} parent=23 // pred_check
          %p267 = pneg %p60
        $region58: #{tpu_custom_call.1} parent=23 // pred_check_branch
          %269 = sbr.rel (%p267) target = $region60
        $region59: #{tpu_custom_call.1} parent=23 // pred_region
          %s271 = ssub.s32 128, 128
          %272 = vsyncadd %s263, %s271
          %s273 = smul.addr %s21, 128
          %s274 = scalar_lea.hbm %s3, %s273
          %s276 = sshll.u32 %s266, 4
          %s277 = int_to_ptr.vmem [resolvable:$true] %s276
          %279 = dma.vmem_to_hbm [thread:$0]  %s277, 128, %s274, %s263
        $region60: #{tpu_custom_call.1} parent=23 // pred_fallthru
          _
      $region24: #{tpu_custom_call.1} parent=5 // pred_fallthru
        _
      %p280 = scmp.le.s32.totalorder 2, %s16
      // Predicated region
      $region61: #{tpu_custom_call.1} parent=5 // pred_check
        %p281 = pneg %p280
      $region62: #{tpu_custom_call.1} parent=5 // pred_check_branch
        %283 = sbr.rel (%p281) target = $region64
      $region63: #{tpu_custom_call.1} parent=5 // pred_region
        %s284 = ssub.s32 %s16, 2
        // Predicated region
        $region65: #{tpu_custom_call.1} parent=63 // pred_check
          %p285 = pneg %p66
        $region66: #{tpu_custom_call.1} parent=63 // pred_check_branch
          %287 = sbr.rel (%p285) target = $region68
        $region67: #{tpu_custom_call.1} parent=63 // pred_region
          %s288 = sand.u32 %s51, 1
          %s289 = scalar_lea.sflag [#allocation7], %s288
          %s290 = sand.u32 %s51, 1
          %s291 = smul.addr %s290, 8
          %s292 = scalar_lea.vmem [#allocation6], %s291
          %293 = dma.done %s289, 128
        $region68: #{tpu_custom_call.1} parent=63 // pred_fallthru
          _
      $region64: #{tpu_custom_call.1} parent=5 // pred_fallthru
        _
    $region6: #{tpu_custom_call.1} parent=1 // loop_footer
      %s20 = sadd.s32 1, %s16
    $region7: #{tpu_custom_call.1} parent=1 // loop_footer_branch
      %15 = sbr.rel target = $region3
    $region8: #{tpu_custom_call.1} parent=1 // loop_exit
      _
    %294 = vsyncpa [#allocation7], 1
    %s295 = scalar_lea.sflag [#allocation7], 1
    %296 = vsyncpa %s295, 1
  %297 = vsyncmov [#allocation3]
  %s298 = vpop.sfrf %297
  %p299 = scmp.eq.s32.totalorder %s298, 0
  %p300 = pneg %p299
  %302 = shalt.err (%p300)
  %s303 = scalar_lea.sflag [#allocation3], 1
  %304 = vsyncmov %s303
  %s305 = vpop.sfrf %304
  %p306 = scmp.eq.s32.totalorder %s305, 0
  %p307 = pneg %p306
  %309 = shalt.err (%p307)
  %s310 = scalar_lea.sflag [#allocation3], 2
  %311 = vsyncmov %s310
  %s312 = vpop.sfrf %311
  %p313 = scmp.eq.s32.totalorder %s312, 0
  %p314 = pneg %p313
  %316 = shalt.err (%p314)
  %s317 = scalar_lea.sflag [#allocation3], 3
  %318 = vsyncmov %s317
  %s319 = vpop.sfrf %318
  %p320 = scmp.eq.s32.totalorder %s319, 0
  %p321 = pneg %p320
  %323 = shalt.err (%p321)
  %s324 = scalar_lea.sflag [#allocation3], 4
  %325 = vsyncmov %s324
  %s326 = vpop.sfrf %325
  %p327 = scmp.eq.s32.totalorder %s326, 0
  %p328 = pneg %p327
  %330 = shalt.err (%p328)
  %s331 = scalar_lea.sflag [#allocation3], 5
  %332 = vsyncmov %s331
  %s333 = vpop.sfrf %332
  %p334 = scmp.eq.s32.totalorder %s333, 0
  %p335 = pneg %p334
  %337 = shalt.err (%p335)
  %s338 = scalar_lea.sflag [#allocation3], 6
  %339 = vsyncmov %s338
  %s340 = vpop.sfrf %339
  %p341 = scmp.eq.s32.totalorder %s340, 0
  %p342 = pneg %p341
  %344 = shalt.err (%p342)
  %s345 = scalar_lea.sflag [#allocation3], 7
  %346 = vsyncmov %s345
  %s347 = vpop.sfrf %346
  %p348 = scmp.eq.s32.totalorder %s347, 0
  %p349 = pneg %p348
  %351 = shalt.err (%p349)

</llo_original>
